<compile_context>
chip_gen: v7x
topology: tpu7x:2x2x1
jax: 0.10.0
libtpu: 0.0.40
codegen_flags: <defaults>
</compile_context>

<pallas_src>
import functools

import jax
import jax.numpy as jnp
from jax.experimental import pallas as pl
from jax.experimental.pallas import tpu as pltpu

LANE = 128      # vreg lane width
SUBLANE = 8     # vreg sublane height (f32)


def _round_up(n, m):
    return ((n + m - 1) // m) * m


# ---------------------------------------------------------------------------
# Tiling plan for the w0 stream
# ---------------------------------------------------------------------------
def plan_tiling(input_dim, max_k_tile=25088, want_split=2):
    """Pick the K tile used to stream w0.

    max_k_tile defaults to 25088 (= 150528 / 6) so the real model runs in
    nk = 6 grid steps with zero w0 padding, and the double-buffered,
    lane-padded w0 tile (~13 MB VMEM) fits comfortably inside v7x's 64 MiB.
    On v5e/v6e (128 MiB VMEM) max_k_tile can be raised to ~50176 (nk = 3).

    Returns (Dp, tk, nk, n_split):
      Dp       padded reduction dim (= tk * nk, multiple of 128)
      tk       K tile (multiple of 128)
      nk       total number of K tiles
      n_split  leading "parallel" grid extent (2 on multi-tile problems so
               v7x can use both TensorCores; harmless on v5e/v6e).
    """
    Dp = _round_up(input_dim, LANE)
    nk = -(-Dp // max_k_tile)
    if nk <= 1:
        return Dp, Dp, 1, 1
    n_split = want_split if nk >= want_split else 1
    nk = _round_up(nk, n_split)
    tk = _round_up(-(-Dp // nk), LANE)
    return tk * nk, tk, nk, n_split


# ---------------------------------------------------------------------------
# Kernel 1: stream w0, accumulate layer-0 gate pre-activations (i | g | o)
# ---------------------------------------------------------------------------
def _gate_accum_kernel(x_ref, w0_ref, pg_ref):
    @pl.when(pl.program_id(1) == 0)
    def _init():
        pg_ref[...] = jnp.zeros_like(pg_ref)

    # (Bp, tk) @ (tk, 3H); bf16 operands, f32 MXU accumulation.
    pg_ref[0] += jnp.dot(x_ref[...], w0_ref[...],
                         preferred_element_type=jnp.float32)


# ---------------------------------------------------------------------------
# Kernel 2: tiny tail — layer-0 cell, layers 1..L-1, fc head
# ---------------------------------------------------------------------------
def _tail_kernel(pg_ref, b_ref, wl_ref, wfc_ref, bfc_ref, out_ref, *,
                 hidden_dim, layer_dim):
    H = hidden_dim

    def cell(gates):
        # gate order i | g | o   (forget gate dropped: f * c0 == 0)
        i = jax.nn.sigmoid(gates[:, 0 * H:1 * H])
        g = jnp.tanh(gates[:, 1 * H:2 * H])
        o = jax.nn.sigmoid(gates[:, 2 * H:3 * H])
        return o * jnp.tanh(i * g)

    # layer 0: combine per-core partial gate sums + (b_ih + b_hh)
    h = cell(jnp.sum(pg_ref[...], axis=0) + b_ref[0])

    # layers 1 .. L-1: tiny (B, H) @ (H, 3H) dots (recurrent term is zero)
    for l in range(layer_dim - 1):
        gates = jnp.dot(h.astype(jnp.bfloat16), wl_ref[l],
                        preferred_element_type=jnp.float32) + b_ref[l + 1]
        h = cell(gates)

    # fc head: (B, H) @ (H, OUT_pad) + b   (lane-dense padded output)
    out_ref[...] = jnp.dot(h.astype(jnp.bfloat16), wfc_ref[...],
                           preferred_element_type=jnp.float32) + bfc_ref[...]


# ---------------------------------------------------------------------------
# One-time parameter preparation (outside jit): pad / reshape weights once so
# the jitted forward never re-copies the large w0.
# ---------------------------------------------------------------------------
def prepare_params(params, *, input_dim, hidden_dim, layer_dim, output_dim,
                   max_k_tile=25088):
    H = hidden_dim
    Dp, tk, nk, n_split = plan_tiling(input_dim, max_k_tile)

    w0 = params["w0"]
    if Dp != input_dim:
        w0 = jnp.zeros((Dp, 3 * H), jnp.bfloat16).at[:input_dim, :].set(w0)

    if layer_dim > 1:
        wl = params["wl"]
    else:
        # Mosaic rejects zero-sized blocks; pass a dummy slab that is never read.
        wl = jnp.zeros((1, H, 3 * H), jnp.bfloat16)

    OUTp = _round_up(output_dim, LANE)
    wfc = jnp.zeros((H, OUTp), jnp.bfloat16).at[:, :output_dim].set(
        params["wfc"])
    bfc = jnp.zeros((1, OUTp), jnp.float32).at[:, :output_dim].set(
        params["bfc"])

    prepared = {"w0": w0, "wl": wl, "b": params["b"], "wfc": wfc, "bfc": bfc}
    plan = dict(Dp=Dp, tk=tk, nk=nk, n_split=n_split, OUTp=OUTp)
    return prepared, plan


# ---------------------------------------------------------------------------
# Forward wrapper (jit this; `plan` ints are baked in statically)
# ---------------------------------------------------------------------------
def lstm_model_forward(x_nchw, prepared, *, hidden_dim, layer_dim, output_dim,
                       Dp, tk, nk, n_split, OUTp):
    """x_nchw: (B, C, H, W). Returns (B, output_dim) float32.

    Valid only for the module's seq_len == 1 / zero-initial-state forward.
    """
    B = x_nchw.shape[0]
    H = hidden_dim
    x2d = x_nchw.reshape(B, -1).astype(jnp.bfloat16)   # torch .view order
    D = x2d.shape[1]
    assert D <= Dp, "prepare_params was planned for a smaller input_dim"

    Bp = _round_up(max(B, SUBLANE), SUBLANE)
    nk_per = nk // n_split

    # Only x (small relative to w0) is padded per call: batch -> sublane
    # multiple, D -> the pre-planned Dp (== D for the real model).
    if (Bp, Dp) == (B, D):
        x_pad = x2d
    else:
        x_pad = jnp.zeros((Bp, Dp), jnp.bfloat16).at[:B, :D].set(x2d)

    # VMEM budget: double-buffered x + lane-padded double-buffered w0 tiles.
    lane3h = _round_up(3 * H, LANE)
    vmem_need = (2 * Bp * tk * 2            # x tiles (bf16)
                 + 2 * tk * lane3h * 2      # w0 tiles (bf16, lane-padded)
                 + 2 * n_split * Bp * lane3h * 4)
    vmem_limit = int(min(48 << 20, max(16 << 20, (vmem_need * 3) // 2)))

    gate_cost = pl.CostEstimate(
        flops=int(2 * Bp * Dp * 3 * H),
        transcendentals=0,
        bytes_accessed=int(Bp * Dp * 2 + Dp * 3 * H * 2
                           + n_split * Bp * 3 * H * 4),
    )

    # ---- Kernel 1: w0 stream -> per-split partial gate accumulators -------
    partial_gates = pl.pallas_call(
        _gate_accum_kernel,
        out_shape=jax.ShapeDtypeStruct((n_split, Bp, 3 * H), jnp.float32),
        grid_spec=pltpu.PrefetchScalarGridSpec(
            num_scalar_prefetch=0,
            grid=(n_split, nk_per),
            in_specs=[
                pl.BlockSpec((Bp, tk),
                             lambda s, k: (0, s * nk_per + k)),      # x
                pl.BlockSpec((tk, 3 * H),
                             lambda s, k: (s * nk_per + k, 0)),      # w0 (streamed)
            ],
            out_specs=pl.BlockSpec((1, Bp, 3 * H), lambda s, k: (s, 0, 0)),
        ),
        compiler_params=pltpu.CompilerParams(
            dimension_semantics=("parallel", "arbitrary"),
            vmem_limit_bytes=vmem_limit,
        ),
        cost_estimate=gate_cost,
    )(x_pad, prepared["w0"])

    # ---- Kernel 2: tiny tail (cell + layers 1..L-1 + fc) -------------------
    n_wl = max(layer_dim - 1, 1)
    tail = functools.partial(_tail_kernel, hidden_dim=H, layer_dim=layer_dim)
    out_pad = pl.pallas_call(
        tail,
        out_shape=jax.ShapeDtypeStruct((Bp, OUTp), jnp.float32),
        grid_spec=pltpu.PrefetchScalarGridSpec(
            num_scalar_prefetch=0,
            grid=(1,),
            in_specs=[
                pl.BlockSpec((n_split, Bp, 3 * H), lambda i: (0, 0, 0)),
                pl.BlockSpec((layer_dim, 1, 3 * H), lambda i: (0, 0, 0)),
                pl.BlockSpec((n_wl, H, 3 * H), lambda i: (0, 0, 0)),
                pl.BlockSpec((H, OUTp), lambda i: (0, 0)),
                pl.BlockSpec((1, OUTp), lambda i: (0, 0)),
            ],
            out_specs=pl.BlockSpec((Bp, OUTp), lambda i: (0, 0)),
        ),
        compiler_params=pltpu.CompilerParams(
            dimension_semantics=("arbitrary",)),
    )(partial_gates, prepared["b"], prepared["wl"], prepared["wfc"],
      prepared["bfc"])

    return out_pad[:B, :output_dim]


# ---------------------------------------------------------------------------
# Deterministic parameter construction (nn.LSTM / nn.Linear shapes, with the
# dead forget-gate columns already pruned; gate/column order i | g | o).
# Weight matrices are stored pre-transposed (right-multiply) and in bf16;
# biases stay f32.
# ---------------------------------------------------------------------------
def make_params(key, input_dim, hidden_dim, layer_dim, output_dim):
    H = hidden_dim
    ks = jax.random.split(key, 6)
    scale = 1.0 / jnp.sqrt(jnp.float32(H))

    w0 = jax.random.uniform(ks[0], (input_dim, 3 * H), jnp.float32,
                            -scale, scale).astype(jnp.bfloat16)
    wl = jax.random.uniform(ks[1], (max(layer_dim - 1, 0), H, 3 * H),
                            jnp.float32, -scale, scale).astype(jnp.bfloat16)
    b_ih = jax.random.uniform(ks[2], (layer_dim, 1, 3 * H), jnp.float32,
                              -scale, scale)
    b_hh = jax.random.uniform(ks[3], (layer_dim, 1, 3 * H), jnp.float32,
                              -scale, scale)
    b = b_ih + b_hh

    wfc = jax.random.uniform(ks[4], (H, output_dim), jnp.float32,
                             -scale, scale).astype(jnp.bfloat16)
    bfc = jax.random.uniform(ks[5], (1, output_dim), jnp.float32,
                             -scale, scale)
    return {"w0": w0, "wl": wl, "b": b, "wfc": wfc, "bfc": bfc}


# ---------------------------------------------------------------------------
# Pure-JAX reference (same math, same bf16 weight quantization)
# ---------------------------------------------------------------------------
def reference_forward(x_nchw, params, *, hidden_dim, layer_dim):
    H = hidden_dim
    B = x_nchw.shape[0]
    x = x_nchw.reshape(B, -1)

    def cell(gates):
        i = jax.nn.sigmoid(gates[:, 0 * H:1 * H])
        g = jnp.tanh(gates[:, 1 * H:2 * H])
        o = jax.nn.sigmoid(gates[:, 2 * H:3 * H])
        return o * jnp.tanh(i * g)

    h = cell(jnp.dot(x.astype(jnp.bfloat16), params["w0"],
                     preferred_element_type=jnp.float32) + params["b"][0])
    for l in range(layer_dim - 1):
        h = cell(jnp.dot(h.astype(jnp.bfloat16), params["wl"][l],
                         preferred_element_type=jnp.float32) + params["b"][l + 1])
    return jnp.dot(h.astype(jnp.bfloat16), params["wfc"],
                   preferred_element_type=jnp.float32) + params["bfc"]


# ---------------------------------------------------------------------------
if __name__ == "__main__":
    # Small shapes consistent with the module (original: 224*224*3 -> 15 -> out)
    B, C, Himg, Wimg = 2, 3, 16, 16
    input_dim = C * Himg * Wimg          # 768
    hidden_dim = 32
    layer_dim = 4
    output_dim = 10

    key = jax.random.PRNGKey(0)
    kx, kp = jax.random.split(key)
    x = jax.random.normal(kx, (B, C, Himg, Wimg), jnp.float32)

    params = make_params(kp, input_dim, hidden_dim, layer_dim, output_dim)
    prepared, plan = prepare_params(params, input_dim=input_dim,
                                    hidden_dim=hidden_dim,
                                    layer_dim=layer_dim,
                                    output_dim=output_dim)

    fwd = jax.jit(functools.partial(lstm_model_forward,
                                    hidden_dim=hidden_dim,
                                    layer_dim=layer_dim,
                                    output_dim=output_dim,
                                    **plan))
    out = jax.block_until_ready(fwd(x, prepared))

    ref = reference_forward(x, params,
                            hidden_dim=hidden_dim, layer_dim=layer_dim)
    assert out.shape == (B, output_dim)
    assert jnp.allclose(out, ref, atol=1e-4, rtol=1e-3), "mismatch vs reference"

    print("KERNEL_OK")
</pallas_src>

<mosaic_0001>
module attributes {stable_mosaic.version = 11 : i64} {
  func.func @_gate_accum_kernel(%arg0: i32, %arg1: i32, %arg2: memref<8x768xbf16, #tpu.memory_space<vmem>>, %arg3: memref<768x96xbf16, #tpu.memory_space<vmem>>, %arg4: memref<1x8x96xf32, #tpu.memory_space<vmem>>) attributes {dimension_semantics = [#tpu.dimension_semantics<parallel>, #tpu.dimension_semantics<arbitrary>], iteration_bounds = array<i64: 1, 1>, scalar_prefetch = 0 : i64, scratch_operands = 0 : i64, tpu.core_type = #tpu.core_type<tc>, window_params = [{transform_indices = @transform_0, window_bounds = array<i64: 8, 768>}, {transform_indices = @transform_1, window_bounds = array<i64: 768, 96>}, {transform_indices = @transform_2, window_bounds = array<i64: 1, 8, 96>}]} {
    %c0_i32 = arith.constant 0 : i32
    %0 = arith.cmpi eq, %arg1, %c0_i32 : i32
    %1 = arith.extui %0 : i1 to i32
    %c0_i32_0 = arith.constant 0 : i32
    %2 = arith.cmpi ne, %1, %c0_i32_0 : i32
    scf.if %2 {
      %cst_10 = arith.constant 0.000000e+00 : f32
      %12 = vector.broadcast %cst_10 : f32 to vector<1x8x96xf32>
      %c0_11 = arith.constant 0 : index
      %c0_12 = arith.constant 0 : index
      %c0_13 = arith.constant 0 : index
      %13 = vector.load %arg4[%c0_11, %c0_12, %c0_13] : memref<1x8x96xf32, #tpu.memory_space<vmem>>, vector<1x8x96xf32>
      tpu.vector_store %arg4[%c0_11, %c0_12, %c0_13], %12 {strides = array<i32>} : memref<1x8x96xf32, #tpu.memory_space<vmem>>, vector<1x8x96xf32>,
    } else {
    }
    %c0 = arith.constant 0 : index
    %c0_1 = arith.constant 0 : index
    %c0_2 = arith.constant 0 : index
    %3 = vector.load %arg4[%c0, %c0_1, %c0_2] : memref<1x8x96xf32, #tpu.memory_space<vmem>>, vector<1x8x96xf32>
    %4 = vector.shape_cast %3 : vector<1x8x96xf32> to vector<8x96xf32>
    %c0_3 = arith.constant 0 : index
    %c0_4 = arith.constant 0 : index
    %5 = vector.load %arg2[%c0_3, %c0_4] : memref<8x768xbf16, #tpu.memory_space<vmem>>, vector<8x768xbf16>
    %c0_5 = arith.constant 0 : index
    %c0_6 = arith.constant 0 : index
    %6 = vector.load %arg3[%c0_5, %c0_6] : memref<768x96xbf16, #tpu.memory_space<vmem>>, vector<768x96xbf16>
    %cst = arith.constant dense<0.000000e+00> : vector<8x96xf32>
    %7 = tpu.matmul %5, %6, %cst {dimension_numbers = #tpu.dot_dimension_numbers<[1], [0], [0], [1], [0, 0, 1, 1], [], []>} : vector<8x768xbf16>, vector<768x96xbf16>, vector<8x96xf32> -> vector<8x96xf32>
    %8 = arith.addf %4, %7 : vector<8x96xf32>
    %c0_7 = arith.constant 0 : index
    %c0_8 = arith.constant 0 : index
    %c0_9 = arith.constant 0 : index
    %9 = vector.load %arg4[%c0_7, %c0_8, %c0_9] : memref<1x8x96xf32, #tpu.memory_space<vmem>>, vector<1x8x96xf32>
    %10 = vector.shape_cast %9 : vector<1x8x96xf32> to vector<8x96xf32>
    %11 = vector.shape_cast %8 : vector<8x96xf32> to vector<1x8x96xf32>
    tpu.vector_store %arg4[%c0_7, %c0_8, %c0_9], %11 {strides = array<i32>} : memref<1x8x96xf32, #tpu.memory_space<vmem>>, vector<1x8x96xf32>,
    return
  }
  func.func @transform_0(%arg0: i32, %arg1: i32) -> (i32, i32) {
    %c1_i32 = arith.constant 1 : i32
    %0 = arith.muli %arg0, %c1_i32 : i32
    %1 = arith.addi %0, %arg1 : i32
    %c0_i32 = arith.constant 0 : i32
    %c0_i32_0 = arith.constant 0 : i32
    return %c0_i32, %1 : i32, i32
  }
  func.func @transform_1(%arg0: i32, %arg1: i32) -> (i32, i32) {
    %c1_i32 = arith.constant 1 : i32
    %0 = arith.muli %arg0, %c1_i32 : i32
    %1 = arith.addi %0, %arg1 : i32
    %c0_i32 = arith.constant 0 : i32
    %c0_i32_0 = arith.constant 0 : i32
    return %1, %c0_i32 : i32, i32
  }
  func.func @transform_2(%arg0: i32, %arg1: i32) -> (i32, i32, i32) {
    %c0_i32 = arith.constant 0 : i32
    %c0_i32_0 = arith.constant 0 : i32
    %c0_i32_1 = arith.constant 0 : i32
    return %arg0, %c0_i32, %c0_i32_0 : i32, i32, i32
  }
}

module attributes {stable_mosaic.version = 11 : i64} {
  func.func @_tail_kernel(%arg0: i32, %arg1: memref<1x8x96xf32, #tpu.memory_space<vmem>>, %arg2: memref<4x1x96xf32, #tpu.memory_space<vmem>>, %arg3: memref<3x32x96xbf16, #tpu.memory_space<vmem>>, %arg4: memref<32x128xbf16, #tpu.memory_space<vmem>>, %arg5: memref<1x128xf32, #tpu.memory_space<vmem>>, %arg6: memref<8x128xf32, #tpu.memory_space<vmem>>) attributes {dimension_semantics = [#tpu.dimension_semantics<arbitrary>], iteration_bounds = array<i64: 1>, scalar_prefetch = 0 : i64, scratch_operands = 0 : i64, tpu.core_type = #tpu.core_type<tc>, window_params = [{pipeline_mode = #tpu.pipeline_mode<synchronous>, transform_indices = @transform_0, window_bounds = array<i64: 1, 8, 96>}, {pipeline_mode = #tpu.pipeline_mode<synchronous>, transform_indices = @transform_1, window_bounds = array<i64: 4, 1, 96>}, {pipeline_mode = #tpu.pipeline_mode<synchronous>, transform_indices = @transform_2, window_bounds = array<i64: 3, 32, 96>}, {pipeline_mode = #tpu.pipeline_mode<synchronous>, transform_indices = @transform_3, window_bounds = array<i64: 32, 128>}, {pipeline_mode = #tpu.pipeline_mode<synchronous>, transform_indices = @transform_4, window_bounds = array<i64: 1, 128>}, {pipeline_mode = #tpu.pipeline_mode<synchronous>, transform_indices = @transform_5, window_bounds = array<i64: 8, 128>}]} {
    %c0 = arith.constant 0 : index
    %c0_0 = arith.constant 0 : index
    %c0_1 = arith.constant 0 : index
    %0 = vector.load %arg1[%c0, %c0_0, %c0_1] : memref<1x8x96xf32, #tpu.memory_space<vmem>>, vector<1x8x96xf32>
    %cst = arith.constant dense<0.000000e+00> : vector<8x96xf32>
    %1 = vector.multi_reduction <add>, %0, %cst [0] : vector<1x8x96xf32> to vector<8x96xf32>
    %c0_2 = arith.constant 0 : index
    %c0_3 = arith.constant 0 : index
    %c0_4 = arith.constant 0 : index
    %2 = vector.load %arg2[%c0_2, %c0_3, %c0_4] : memref<4x1x96xf32, #tpu.memory_space<vmem>>, vector<1x1x96xf32>
    %3 = vector.shape_cast %2 : vector<1x1x96xf32> to vector<1x96xf32>
    %4 = vector.broadcast %3 : vector<1x96xf32> to vector<8x96xf32>
    %5 = arith.addf %1, %4 : vector<8x96xf32>
    %6 = vector.extract_strided_slice %5 {offsets = [0, 0], sizes = [8, 32], strides = [1, 1]} : vector<8x96xf32> to vector<8x32xf32>
    %7 = arith.negf %6 : vector<8x32xf32>
    %8 = math.exp %7 : vector<8x32xf32>
    %cst_5 = arith.constant 1.000000e+00 : f32
    %9 = vector.broadcast %cst_5 : f32 to vector<8x32xf32>
    %10 = arith.addf %9, %8 : vector<8x32xf32>
    %11 = arith.divf %9, %10 : vector<8x32xf32>
    %12 = vector.extract_strided_slice %5 {offsets = [0, 32], sizes = [8, 32], strides = [1, 1]} : vector<8x96xf32> to vector<8x32xf32>
    %13 = math.tanh %12 : vector<8x32xf32>
    %14 = vector.extract_strided_slice %5 {offsets = [0, 64], sizes = [8, 32], strides = [1, 1]} : vector<8x96xf32> to vector<8x32xf32>
    %15 = arith.negf %14 : vector<8x32xf32>
    %16 = math.exp %15 : vector<8x32xf32>
    %cst_6 = arith.constant 1.000000e+00 : f32
    %17 = vector.broadcast %cst_6 : f32 to vector<8x32xf32>
    %18 = arith.addf %17, %16 : vector<8x32xf32>
    %19 = arith.divf %17, %18 : vector<8x32xf32>
    %20 = arith.mulf %11, %13 : vector<8x32xf32>
    %21 = math.tanh %20 : vector<8x32xf32>
    %22 = arith.mulf %19, %21 : vector<8x32xf32>
    %23 = arith.truncf %22 : vector<8x32xf32> to vector<8x32xbf16>
    %c0_7 = arith.constant 0 : index
    %c0_8 = arith.constant 0 : index
    %c0_9 = arith.constant 0 : index
    %24 = vector.load %arg3[%c0_7, %c0_8, %c0_9] : memref<3x32x96xbf16, #tpu.memory_space<vmem>>, vector<1x32x96xbf16>
    %25 = vector.shape_cast %24 : vector<1x32x96xbf16> to vector<32x96xbf16>
    %cst_10 = arith.constant dense<0.000000e+00> : vector<8x96xf32>
    %26 = tpu.matmul %23, %25, %cst_10 {dimension_numbers = #tpu.dot_dimension_numbers<[1], [0], [0], [1], [0, 0, 1, 1], [], []>} : vector<8x32xbf16>, vector<32x96xbf16>, vector<8x96xf32> -> vector<8x96xf32>
    %c1 = arith.constant 1 : index
    %c0_11 = arith.constant 0 : index
    %c0_12 = arith.constant 0 : index
    %27 = vector.load %arg2[%c1, %c0_11, %c0_12] : memref<4x1x96xf32, #tpu.memory_space<vmem>>, vector<1x1x96xf32>
    %28 = vector.shape_cast %27 : vector<1x1x96xf32> to vector<1x96xf32>
    %29 = vector.broadcast %28 : vector<1x96xf32> to vector<8x96xf32>
    %30 = arith.addf %26, %29 : vector<8x96xf32>
    %31 = vector.extract_strided_slice %30 {offsets = [0, 0], sizes = [8, 32], strides = [1, 1]} : vector<8x96xf32> to vector<8x32xf32>
    %32 = arith.negf %31 : vector<8x32xf32>
    %33 = math.exp %32 : vector<8x32xf32>
    %cst_13 = arith.constant 1.000000e+00 : f32
    %34 = vector.broadcast %cst_13 : f32 to vector<8x32xf32>
    %35 = arith.addf %34, %33 : vector<8x32xf32>
    %36 = arith.divf %34, %35 : vector<8x32xf32>
    %37 = vector.extract_strided_slice %30 {offsets = [0, 32], sizes = [8, 32], strides = [1, 1]} : vector<8x96xf32> to vector<8x32xf32>
    %38 = math.tanh %37 : vector<8x32xf32>
    %39 = vector.extract_strided_slice %30 {offsets = [0, 64], sizes = [8, 32], strides = [1, 1]} : vector<8x96xf32> to vector<8x32xf32>
    %40 = arith.negf %39 : vector<8x32xf32>
    %41 = math.exp %40 : vector<8x32xf32>
    %cst_14 = arith.constant 1.000000e+00 : f32
    %42 = vector.broadcast %cst_14 : f32 to vector<8x32xf32>
    %43 = arith.addf %42, %41 : vector<8x32xf32>
    %44 = arith.divf %42, %43 : vector<8x32xf32>
    %45 = arith.mulf %36, %38 : vector<8x32xf32>
    %46 = math.tanh %45 : vector<8x32xf32>
    %47 = arith.mulf %44, %46 : vector<8x32xf32>
    %48 = arith.truncf %47 : vector<8x32xf32> to vector<8x32xbf16>
    %c1_15 = arith.constant 1 : index
    %c0_16 = arith.constant 0 : index
    %c0_17 = arith.constant 0 : index
    %49 = vector.load %arg3[%c1_15, %c0_16, %c0_17] : memref<3x32x96xbf16, #tpu.memory_space<vmem>>, vector<1x32x96xbf16>
    %50 = vector.shape_cast %49 : vector<1x32x96xbf16> to vector<32x96xbf16>
    %cst_18 = arith.constant dense<0.000000e+00> : vector<8x96xf32>
    %51 = tpu.matmul %48, %50, %cst_18 {dimension_numbers = #tpu.dot_dimension_numbers<[1], [0], [0], [1], [0, 0, 1, 1], [], []>} : vector<8x32xbf16>, vector<32x96xbf16>, vector<8x96xf32> -> vector<8x96xf32>
    %c2 = arith.constant 2 : index
    %c0_19 = arith.constant 0 : index
    %c0_20 = arith.constant 0 : index
    %52 = vector.load %arg2[%c2, %c0_19, %c0_20] : memref<4x1x96xf32, #tpu.memory_space<vmem>>, vector<1x1x96xf32>
    %53 = vector.shape_cast %52 : vector<1x1x96xf32> to vector<1x96xf32>
    %54 = vector.broadcast %53 : vector<1x96xf32> to vector<8x96xf32>
    %55 = arith.addf %51, %54 : vector<8x96xf32>
    %56 = vector.extract_strided_slice %55 {offsets = [0, 0], sizes = [8, 32], strides = [1, 1]} : vector<8x96xf32> to vector<8x32xf32>
    %57 = arith.negf %56 : vector<8x32xf32>
    %58 = math.exp %57 : vector<8x32xf32>
    %cst_21 = arith.constant 1.000000e+00 : f32
    %59 = vector.broadcast %cst_21 : f32 to vector<8x32xf32>
    %60 = arith.addf %59, %58 : vector<8x32xf32>
    %61 = arith.divf %59, %60 : vector<8x32xf32>
    %62 = vector.extract_strided_slice %55 {offsets = [0, 32], sizes = [8, 32], strides = [1, 1]} : vector<8x96xf32> to vector<8x32xf32>
    %63 = math.tanh %62 : vector<8x32xf32>
    %64 = vector.extract_strided_slice %55 {offsets = [0, 64], sizes = [8, 32], strides = [1, 1]} : vector<8x96xf32> to vector<8x32xf32>
    %65 = arith.negf %64 : vector<8x32xf32>
    %66 = math.exp %65 : vector<8x32xf32>
    %cst_22 = arith.constant 1.000000e+00 : f32
    %67 = vector.broadcast %cst_22 : f32 to vector<8x32xf32>
    %68 = arith.addf %67, %66 : vector<8x32xf32>
    %69 = arith.divf %67, %68 : vector<8x32xf32>
    %70 = arith.mulf %61, %63 : vector<8x32xf32>
    %71 = math.tanh %70 : vector<8x32xf32>
    %72 = arith.mulf %69, %71 : vector<8x32xf32>
    %73 = arith.truncf %72 : vector<8x32xf32> to vector<8x32xbf16>
    %c2_23 = arith.constant 2 : index
    %c0_24 = arith.constant 0 : index
    %c0_25 = arith.constant 0 : index
    %74 = vector.load %arg3[%c2_23, %c0_24, %c0_25] : memref<3x32x96xbf16, #tpu.memory_space<vmem>>, vector<1x32x96xbf16>
    %75 = vector.shape_cast %74 : vector<1x32x96xbf16> to vector<32x96xbf16>
    %cst_26 = arith.constant dense<0.000000e+00> : vector<8x96xf32>
    %76 = tpu.matmul %73, %75, %cst_26 {dimension_numbers = #tpu.dot_dimension_numbers<[1], [0], [0], [1], [0, 0, 1, 1], [], []>} : vector<8x32xbf16>, vector<32x96xbf16>, vector<8x96xf32> -> vector<8x96xf32>
    %c3 = arith.constant 3 : index
    %c0_27 = arith.constant 0 : index
    %c0_28 = arith.constant 0 : index
    %77 = vector.load %arg2[%c3, %c0_27, %c0_28] : memref<4x1x96xf32, #tpu.memory_space<vmem>>, vector<1x1x96xf32>
    %78 = vector.shape_cast %77 : vector<1x1x96xf32> to vector<1x96xf32>
    %79 = vector.broadcast %78 : vector<1x96xf32> to vector<8x96xf32>
    %80 = arith.addf %76, %79 : vector<8x96xf32>
    %81 = vector.extract_strided_slice %80 {offsets = [0, 0], sizes = [8, 32], strides = [1, 1]} : vector<8x96xf32> to vector<8x32xf32>
    %82 = arith.negf %81 : vector<8x32xf32>
    %83 = math.exp %82 : vector<8x32xf32>
    %cst_29 = arith.constant 1.000000e+00 : f32
    %84 = vector.broadcast %cst_29 : f32 to vector<8x32xf32>
    %85 = arith.addf %84, %83 : vector<8x32xf32>
    %86 = arith.divf %84, %85 : vector<8x32xf32>
    %87 = vector.extract_strided_slice %80 {offsets = [0, 32], sizes = [8, 32], strides = [1, 1]} : vector<8x96xf32> to vector<8x32xf32>
    %88 = math.tanh %87 : vector<8x32xf32>
    %89 = vector.extract_strided_slice %80 {offsets = [0, 64], sizes = [8, 32], strides = [1, 1]} : vector<8x96xf32> to vector<8x32xf32>
    %90 = arith.negf %89 : vector<8x32xf32>
    %91 = math.exp %90 : vector<8x32xf32>
    %cst_30 = arith.constant 1.000000e+00 : f32
    %92 = vector.broadcast %cst_30 : f32 to vector<8x32xf32>
    %93 = arith.addf %92, %91 : vector<8x32xf32>
    %94 = arith.divf %92, %93 : vector<8x32xf32>
    %95 = arith.mulf %86, %88 : vector<8x32xf32>
    %96 = math.tanh %95 : vector<8x32xf32>
    %97 = arith.mulf %94, %96 : vector<8x32xf32>
    %98 = arith.truncf %97 : vector<8x32xf32> to vector<8x32xbf16>
    %c0_31 = arith.constant 0 : index
    %c0_32 = arith.constant 0 : index
    %99 = vector.load %arg4[%c0_31, %c0_32] : memref<32x128xbf16, #tpu.memory_space<vmem>>, vector<32x128xbf16>
    %cst_33 = arith.constant dense<0.000000e+00> : vector<8x128xf32>
    %100 = tpu.matmul %98, %99, %cst_33 {dimension_numbers = #tpu.dot_dimension_numbers<[1], [0], [0], [1], [0, 0, 1, 1], [], []>} : vector<8x32xbf16>, vector<32x128xbf16>, vector<8x128xf32> -> vector<8x128xf32>
    %c0_34 = arith.constant 0 : index
    %c0_35 = arith.constant 0 : index
    %101 = vector.load %arg5[%c0_34, %c0_35] : memref<1x128xf32, #tpu.memory_space<vmem>>, vector<1x128xf32>
    %102 = vector.broadcast %101 : vector<1x128xf32> to vector<8x128xf32>
    %103 = arith.addf %100, %102 : vector<8x128xf32>
    %c0_36 = arith.constant 0 : index
    %c0_37 = arith.constant 0 : index
    %104 = vector.load %arg6[%c0_36, %c0_37] : memref<8x128xf32, #tpu.memory_space<vmem>>, vector<8x128xf32>
    tpu.vector_store %arg6[%c0_36, %c0_37], %103 {strides = array<i32>} : memref<8x128xf32, #tpu.memory_space<vmem>>, vector<8x128xf32>,
    return
  }
  func.func @transform_0(%arg0: i32) -> (i32, i32, i32) {
    %c0_i32 = arith.constant 0 : i32
    %c0_i32_0 = arith.constant 0 : i32
    %c0_i32_1 = arith.constant 0 : i32
    %c0_i32_2 = arith.constant 0 : i32
    return %c0_i32, %c0_i32_0, %c0_i32_1 : i32, i32, i32
  }
  func.func @transform_1(%arg0: i32) -> (i32, i32, i32) {
    %c0_i32 = arith.constant 0 : i32
    %c0_i32_0 = arith.constant 0 : i32
    %c0_i32_1 = arith.constant 0 : i32
    %c0_i32_2 = arith.constant 0 : i32
    return %c0_i32, %c0_i32_0, %c0_i32_1 : i32, i32, i32
  }
  func.func @transform_2(%arg0: i32) -> (i32, i32, i32) {
    %c0_i32 = arith.constant 0 : i32
    %c0_i32_0 = arith.constant 0 : i32
    %c0_i32_1 = arith.constant 0 : i32
    %c0_i32_2 = arith.constant 0 : i32
    return %c0_i32, %c0_i32_0, %c0_i32_1 : i32, i32, i32
  }
  func.func @transform_3(%arg0: i32) -> (i32, i32) {
    %c0_i32 = arith.constant 0 : i32
    %c0_i32_0 = arith.constant 0 : i32
    %c0_i32_1 = arith.constant 0 : i32
    return %c0_i32, %c0_i32_0 : i32, i32
  }
  func.func @transform_4(%arg0: i32) -> (i32, i32) {
    %c0_i32 = arith.constant 0 : i32
    %c0_i32_0 = arith.constant 0 : i32
    %c0_i32_1 = arith.constant 0 : i32
    return %c0_i32, %c0_i32_0 : i32, i32
  }
  func.func @transform_5(%arg0: i32) -> (i32, i32) {
    %c0_i32 = arith.constant 0 : i32
    %c0_i32_0 = arith.constant 0 : i32
    %c0_i32_1 = arith.constant 0 : i32
    return %c0_i32, %c0_i32_0 : i32, i32
  }
}

</mosaic_0001>

<llo_original>
// kernel: lstm_model_forward.3
$region0: #{lstm_model_forward.3}
  #allocation0 [shape = 'u32[]', space=smem, size = 0x4, offset = 0x4, fixed_abs, tag = 'smem constant byte address 0x4 - core index']
  #allocation1 [shape = 'u32[144,128]{1,0:T(1,128)}', space=vmem, size = 0x12000, scoped, tag = 'internal scratch']
  %s0 = inlined_call_operand.vmem [shape: f32[1,8,96], index: 0, kind: input, shape index: {}]
  %s1 = inlined_call_operand.vmem [shape: f32[4,1,96], index: 1, kind: input, shape index: {}]
  %s2 = inlined_call_operand.vmem [shape: bf16[3,32,96], index: 2, kind: input, shape index: {}]
  %s3 = inlined_call_operand.vmem [shape: bf16[32,128], index: 3, kind: input, shape index: {}]
  %s4 = inlined_call_operand.vmem [shape: f32[1,128], index: 4, kind: input, shape index: {}]
  %s5 = inlined_call_operand.vmem [shape: f32[8,128], index: 5, kind: output, shape index: {}]
  %s6 = sld [smem:[#allocation0]]
  $region30: #{lstm_model_forward.3} parent=0
    _
  %s8 = ssub.s32 1, %s6
  %s9 = scalar_select 0, %s8, %s6
  // Predicated region
  $region2: #{lstm_model_forward.3} parent=0 // pred_check
    _
  $region3: #{lstm_model_forward.3} parent=0 // pred_check_branch
    %11 = sbr.rel (0) target = $region5
  $region4: #{lstm_model_forward.3} parent=0 // pred_region
    _
  $region5: #{lstm_model_forward.3} parent=0 // pred_fallthru
    _
  // Predicated region
  $region6: #{lstm_model_forward.3} parent=0 // pred_check
    _
  $region7: #{lstm_model_forward.3} parent=0 // pred_check_branch
    %13 = sbr.rel (0) target = $region9
  $region8: #{lstm_model_forward.3} parent=0 // pred_region
    _
  $region9: #{lstm_model_forward.3} parent=0 // pred_fallthru
    _
  // Predicated region
  $region10: #{lstm_model_forward.3} parent=0 // pred_check
    _
  $region11: #{lstm_model_forward.3} parent=0 // pred_check_branch
    %15 = sbr.rel (0) target = $region13
  $region12: #{lstm_model_forward.3} parent=0 // pred_region
    _
  $region13: #{lstm_model_forward.3} parent=0 // pred_fallthru
    _
  // Predicated region
  $region14: #{lstm_model_forward.3} parent=0 // pred_check
    _
  $region15: #{lstm_model_forward.3} parent=0 // pred_check_branch
    %17 = sbr.rel (0) target = $region17
  $region16: #{lstm_model_forward.3} parent=0 // pred_region
    _
  $region17: #{lstm_model_forward.3} parent=0 // pred_fallthru
    _
  // Predicated region
  $region18: #{lstm_model_forward.3} parent=0 // pred_check
    _
  $region19: #{lstm_model_forward.3} parent=0 // pred_check_branch
    %19 = sbr.rel (0) target = $region21
  $region20: #{lstm_model_forward.3} parent=0 // pred_region
    _
  $region21: #{lstm_model_forward.3} parent=0 // pred_fallthru
    _
  %v21 = vld [vmem:[%s0] sm:$0xff]
  %v22 = vadd.f32 %v21, 0.0
  %v23 = vld [vmem:[%s1] sm:$0x1]
  %v25 = vlaneseq
  %v26 = vshrl.u32 %v25, 7
  %v27 = vsub.s32 0, %v26
  %v28 = vrot.slane %v23, %v27
  %v30 = vadd.f32 %v22, %v28
  %v31 = vxor.u32 %v30, 2147483648
  %v32 = vmul.f32 %v31, 1.442695
  %v33 = vpow.pop %v32
  %v34 = vadd.f32 %v33, 1.0
  %v35 = vrcp.pop %v34
  %v36 = vmul.f32 1.0, %v35
  %v37 = vtanh.pop %v30
  %39 = vrot.lane.b32.xlu0 %v37, 96
  %v40 = vpop.permute.xlu0 %39
  %v42 = vmul.f32 %v36, %v40
  %v43 = vtanh.pop %v42
  %45 = vrot.lane.b32.xlu0 %v43, 64
  %v46 = vpop.permute.xlu0 %45
  %v48 = vmul.f32 %v36, %v46
  %v49 = vpack.c.bf16 %v48, %v48
  %v50 = vld [vmem:[%s2] sm:$0xf]
  %v51 = vld [vmem:[%s2 + $0x4] sm:$0xf]
  %v52 = vld [vmem:[%s2 + $0x8] sm:$0xf]
  %v53 = vld [vmem:[%s2 + $0xc] sm:$0xf]
  %s54 = scalar_lea.vmem %s1, 1
  %v55 = vld [vmem:[%s54] sm:$0x1]
  %v57 = vlaneseq
  %v58 = vshrl.u32 %v57, 7
  %v59 = vsub.s32 0, %v58
  %v60 = vrot.slane %v55, %v59
  %63 = vrot.lane.b32.xlu0 %v49, 64
  %v64 = vpop.permute.xlu0 %63
  %v69 = vunpack.c.l.b16 %v50
  %v70 = vunpack.c.l.b16 %v51
  %v71 = vunpack.c.l.b16 %v52
  %v72 = vunpack.c.l.b16 %v53
  %v73 = vpack.c.b16 %v70, %v69
  %v74 = vpack.c.b16 %v72, %v71
  %vm77 = vcmask 261120
  %v79 = vsel %vm77, %v64, 0
  %81 = vmatprep.subr.bf16.mxu0 0
  %82 = vmatpush1.bf16.msra.mxu0 %v73
  %83 = vmatprep.subr.bf16.mxu0 0
  %84 = vmatpush1.bf16.msra.mxu0 %v74
  %85 = vmatprep.subr.bf16.mxu0 0
  %86 = vmatpush1.bf16.msra.mxu0 0
  %87 = vmatprep.subr.bf16.mxu0 0
  %88 = vmatpush1.bf16.msra.mxu0 0
  %89 = vmatprep.subr.bf16.mxu0 0
  %90 = vmatpush1.bf16.msra.mxu0 0
  %91 = vmatprep.subr.bf16.mxu0 0
  %92 = vmatpush1.bf16.msra.mxu0 0
  %93 = vmatprep.subr.bf16.mxu0 0
  %94 = vmatpush1.bf16.msra.mxu0 0
  %95 = vmatprep.subr.bf16.mxu0 0
  %96 = vmatpush1.bf16.msra.mxu0 0
  %97 = vmatprep.subr.bf16.mxu0 0
  %98 = vmatpush1.bf16.msra.mxu0 0
  %99 = vmatprep.subr.bf16.mxu0 0
  %100 = vmatpush1.bf16.msra.mxu0 0
  %101 = vmatprep.subr.bf16.mxu0 0
  %102 = vmatpush1.bf16.msra.mxu0 0
  %103 = vmatprep.subr.bf16.mxu0 0
  %104 = vmatpush1.bf16.msra.mxu0 0
  %105 = vmatprep.subr.bf16.mxu0 0
  %106 = vmatpush1.bf16.msra.mxu0 0
  %107 = vmatprep.subr.bf16.mxu0 0
  %108 = vmatpush1.bf16.msra.mxu0 0
  %109 = vmatprep.subr.bf16.mxu0 0
  %110 = vmatpush1.bf16.msra.mxu0 0
  %111 = vmatprep.subr.bf16.mxu0 0
  %112 = vmatpush1.bf16.msra.mxu0 0
  %113 = vmatprep.mubr.bf16.mxu0 0
  %114 = vmatmul.mubr.bf16.gmra.mrb[0].mxu0 %v79
  %v115 = vpop.f32.mrb[0].mxu0
  %v116 = vadd.f32 %v60, %v115
  %v117 = vpop.f32.mrb[0].mxu0
  %v118 = vpop.f32.mrb[0].mxu0
  %v119 = vpop.f32.mrb[0].mxu0
  %120 = vdwg.mxu0
  %v121 = vxor.u32 %v116, 2147483648
  %v122 = vmul.f32 %v121, 1.442695
  %v123 = vpow.pop %v122
  %v124 = vadd.f32 %v123, 1.0
  %v125 = vrcp.pop %v124
  %v126 = vmul.f32 1.0, %v125
  %v127 = vtanh.pop %v116
  %129 = vrot.lane.b32.xlu0 %v127, 96
  %v130 = vpop.permute.xlu0 %129
  %v132 = vmul.f32 %v126, %v130
  %v133 = vtanh.pop %v132
  %135 = vrot.lane.b32.xlu0 %v133, 64
  %v136 = vpop.permute.xlu0 %135
  %v138 = vmul.f32 %v126, %v136
  %v139 = vpack.c.bf16 %v138, %v138
  %s140 = scalar_lea.vmem %s2, 16
  %v141 = vld [vmem:[%s140] sm:$0xf]
  %v142 = vld [vmem:[%s140 + $0x4] sm:$0xf]
  %v143 = vld [vmem:[%s140 + $0x8] sm:$0xf]
  %v144 = vld [vmem:[%s140 + $0xc] sm:$0xf]
  %s145 = scalar_lea.vmem %s1, 2
  %v146 = vld [vmem:[%s145] sm:$0x1]
  %v148 = vlaneseq
  %v149 = vshrl.u32 %v148, 7
  %v150 = vsub.s32 0, %v149
  %v151 = vrot.slane %v146, %v150
  %154 = vrot.lane.b32.xlu0 %v139, 64
  %v155 = vpop.permute.xlu0 %154
  %v160 = vunpack.c.l.b16 %v141
  %v161 = vunpack.c.l.b16 %v142
  %v162 = vunpack.c.l.b16 %v143
  %v163 = vunpack.c.l.b16 %v144
  %v164 = vpack.c.b16 %v161, %v160
  %v165 = vpack.c.b16 %v163, %v162
  %v169 = vsel %vm77, %v155, 0
  %171 = vmatprep.subr.bf16.mxu0 0
  %172 = vmatpush1.bf16.msra.mxu0 %v164
  %173 = vmatprep.subr.bf16.mxu0 0
  %174 = vmatpush1.bf16.msra.mxu0 %v165
  %175 = vmatprep.subr.bf16.mxu0 0
  %176 = vmatpush1.bf16.msra.mxu0 0
  %177 = vmatprep.subr.bf16.mxu0 0
  %178 = vmatpush1.bf16.msra.mxu0 0
  %179 = vmatprep.subr.bf16.mxu0 0
  %180 = vmatpush1.bf16.msra.mxu0 0
  %181 = vmatprep.subr.bf16.mxu0 0
  %182 = vmatpush1.bf16.msra.mxu0 0
  %183 = vmatprep.subr.bf16.mxu0 0
  %184 = vmatpush1.bf16.msra.mxu0 0
  %185 = vmatprep.subr.bf16.mxu0 0
  %186 = vmatpush1.bf16.msra.mxu0 0
  %187 = vmatprep.subr.bf16.mxu0 0
  %188 = vmatpush1.bf16.msra.mxu0 0
  %189 = vmatprep.subr.bf16.mxu0 0
  %190 = vmatpush1.bf16.msra.mxu0 0
  %191 = vmatprep.subr.bf16.mxu0 0
  %192 = vmatpush1.bf16.msra.mxu0 0
  %193 = vmatprep.subr.bf16.mxu0 0
  %194 = vmatpush1.bf16.msra.mxu0 0
  %195 = vmatprep.subr.bf16.mxu0 0
  %196 = vmatpush1.bf16.msra.mxu0 0
  %197 = vmatprep.subr.bf16.mxu0 0
  %198 = vmatpush1.bf16.msra.mxu0 0
  %199 = vmatprep.subr.bf16.mxu0 0
  %200 = vmatpush1.bf16.msra.mxu0 0
  %201 = vmatprep.subr.bf16.mxu0 0
  %202 = vmatpush1.bf16.msra.mxu0 0
  %203 = vmatprep.mubr.bf16.mxu0 0
  %204 = vmatmul.mubr.bf16.gmra.mrb[0].mxu0 %v169
  %v205 = vpop.f32.mrb[0].mxu0
  %v206 = vadd.f32 %v151, %v205
  %v207 = vpop.f32.mrb[0].mxu0
  %v208 = vpop.f32.mrb[0].mxu0
  %v209 = vpop.f32.mrb[0].mxu0
  %210 = vdwg.mxu0
  %v211 = vxor.u32 %v206, 2147483648
  %v212 = vmul.f32 %v211, 1.442695
  %v213 = vpow.pop %v212
  %v214 = vadd.f32 %v213, 1.0
  %v215 = vrcp.pop %v214
  %v216 = vmul.f32 1.0, %v215
  %v217 = vtanh.pop %v206
  %219 = vrot.lane.b32.xlu0 %v217, 96
  %v220 = vpop.permute.xlu0 %219
  %v222 = vmul.f32 %v216, %v220
  %v223 = vtanh.pop %v222
  %225 = vrot.lane.b32.xlu0 %v223, 64
  %v226 = vpop.permute.xlu0 %225
  %v228 = vmul.f32 %v216, %v226
  %v229 = vpack.c.bf16 %v228, %v228
  %s230 = scalar_lea.vmem %s2, 32
  %v231 = vld [vmem:[%s230] sm:$0xf]
  %v232 = vld [vmem:[%s230 + $0x4] sm:$0xf]
  %v233 = vld [vmem:[%s230 + $0x8] sm:$0xf]
  %v234 = vld [vmem:[%s230 + $0xc] sm:$0xf]
  %s235 = scalar_lea.vmem %s1, 3
  %v236 = vld [vmem:[%s235] sm:$0x1]
  %v238 = vlaneseq
  %v239 = vshrl.u32 %v238, 7
  %v240 = vsub.s32 0, %v239
  %v241 = vrot.slane %v236, %v240
  %244 = vrot.lane.b32.xlu0 %v229, 64
  %v245 = vpop.permute.xlu0 %244
  %v250 = vunpack.c.l.b16 %v231
  %v251 = vunpack.c.l.b16 %v232
  %v252 = vunpack.c.l.b16 %v233
  %v253 = vunpack.c.l.b16 %v234
  %v254 = vpack.c.b16 %v251, %v250
  %v255 = vpack.c.b16 %v253, %v252
  %v259 = vsel %vm77, %v245, 0
  %261 = vmatprep.subr.bf16.mxu0 0
  %262 = vmatpush1.bf16.msra.mxu0 %v254
  %263 = vmatprep.subr.bf16.mxu0 0
  %264 = vmatpush1.bf16.msra.mxu0 %v255
  %265 = vmatprep.subr.bf16.mxu0 0
  %266 = vmatpush1.bf16.msra.mxu0 0
  %267 = vmatprep.subr.bf16.mxu0 0
  %268 = vmatpush1.bf16.msra.mxu0 0
  %269 = vmatprep.subr.bf16.mxu0 0
  %270 = vmatpush1.bf16.msra.mxu0 0
  %271 = vmatprep.subr.bf16.mxu0 0
  %272 = vmatpush1.bf16.msra.mxu0 0
  %273 = vmatprep.subr.bf16.mxu0 0
  %274 = vmatpush1.bf16.msra.mxu0 0
  %275 = vmatprep.subr.bf16.mxu0 0
  %276 = vmatpush1.bf16.msra.mxu0 0
  %277 = vmatprep.subr.bf16.mxu0 0
  %278 = vmatpush1.bf16.msra.mxu0 0
  %279 = vmatprep.subr.bf16.mxu0 0
  %280 = vmatpush1.bf16.msra.mxu0 0
  %281 = vmatprep.subr.bf16.mxu0 0
  %282 = vmatpush1.bf16.msra.mxu0 0
  %283 = vmatprep.subr.bf16.mxu0 0
  %284 = vmatpush1.bf16.msra.mxu0 0
  %285 = vmatprep.subr.bf16.mxu0 0
  %286 = vmatpush1.bf16.msra.mxu0 0
  %287 = vmatprep.subr.bf16.mxu0 0
  %288 = vmatpush1.bf16.msra.mxu0 0
  %289 = vmatprep.subr.bf16.mxu0 0
  %290 = vmatpush1.bf16.msra.mxu0 0
  %291 = vmatprep.subr.bf16.mxu0 0
  %292 = vmatpush1.bf16.msra.mxu0 0
  %293 = vmatprep.mubr.bf16.mxu0 0
  %294 = vmatmul.mubr.bf16.gmra.mrb[0].mxu0 %v259
  %v295 = vpop.f32.mrb[0].mxu0
  %v296 = vadd.f32 %v241, %v295
  %v297 = vpop.f32.mrb[0].mxu0
  %v298 = vpop.f32.mrb[0].mxu0
  %v299 = vpop.f32.mrb[0].mxu0
  %300 = vdwg.mxu0
  %v301 = vxor.u32 %v296, 2147483648
  %v302 = vmul.f32 %v301, 1.442695
  %v303 = vpow.pop %v302
  %v304 = vadd.f32 %v303, 1.0
  %v305 = vrcp.pop %v304
  %v306 = vmul.f32 1.0, %v305
  %v307 = vtanh.pop %v296
  %309 = vrot.lane.b32.xlu0 %v307, 96
  %v310 = vpop.permute.xlu0 %309
  %v312 = vmul.f32 %v306, %v310
  %v313 = vtanh.pop %v312
  %315 = vrot.lane.b32.xlu0 %v313, 64
  %v316 = vpop.permute.xlu0 %315
  %v318 = vmul.f32 %v306, %v316
  %v319 = vpack.c.bf16 %v318, %v318
  %v320 = vld [vmem:[%s3] sm:$0xf]
  %v321 = vld [vmem:[%s3 + $0x4] sm:$0xf]
  %v322 = vld [vmem:[%s3 + $0x8] sm:$0xf]
  %v323 = vld [vmem:[%s3 + $0xc] sm:$0xf]
  %v324 = vld [vmem:[%s4] sm:$0x1]
  %v326 = vlaneseq
  %v327 = vshrl.u32 %v326, 7
  %v328 = vsub.s32 0, %v327
  %v329 = vrot.slane %v324, %v328
  %332 = vrot.lane.b32.xlu0 %v319, 64
  %v333 = vpop.permute.xlu0 %332
  %v338 = vunpack.c.l.b16 %v320
  %v339 = vunpack.c.l.b16 %v321
  %v340 = vunpack.c.l.b16 %v322
  %v341 = vunpack.c.l.b16 %v323
  %v342 = vpack.c.b16 %v339, %v338
  %v343 = vpack.c.b16 %v341, %v340
  %v347 = vsel %vm77, %v333, 0
  %349 = vmatprep.subr.bf16.mxu0 0
  %350 = vmatpush1.bf16.msra.mxu0 %v342
  %351 = vmatprep.subr.bf16.mxu0 0
  %352 = vmatpush1.bf16.msra.mxu0 %v343
  %353 = vmatprep.subr.bf16.mxu0 0
  %354 = vmatpush1.bf16.msra.mxu0 0
  %355 = vmatprep.subr.bf16.mxu0 0
  %356 = vmatpush1.bf16.msra.mxu0 0
  %357 = vmatprep.subr.bf16.mxu0 0
  %358 = vmatpush1.bf16.msra.mxu0 0
  %359 = vmatprep.subr.bf16.mxu0 0
  %360 = vmatpush1.bf16.msra.mxu0 0
  %361 = vmatprep.subr.bf16.mxu0 0
  %362 = vmatpush1.bf16.msra.mxu0 0
  %363 = vmatprep.subr.bf16.mxu0 0
  %364 = vmatpush1.bf16.msra.mxu0 0
  %365 = vmatprep.subr.bf16.mxu0 0
  %366 = vmatpush1.bf16.msra.mxu0 0
  %367 = vmatprep.subr.bf16.mxu0 0
  %368 = vmatpush1.bf16.msra.mxu0 0
  %369 = vmatprep.subr.bf16.mxu0 0
  %370 = vmatpush1.bf16.msra.mxu0 0
  %371 = vmatprep.subr.bf16.mxu0 0
  %372 = vmatpush1.bf16.msra.mxu0 0
  %373 = vmatprep.subr.bf16.mxu0 0
  %374 = vmatpush1.bf16.msra.mxu0 0
  %375 = vmatprep.subr.bf16.mxu0 0
  %376 = vmatpush1.bf16.msra.mxu0 0
  %377 = vmatprep.subr.bf16.mxu0 0
  %378 = vmatpush1.bf16.msra.mxu0 0
  %379 = vmatprep.subr.bf16.mxu0 0
  %380 = vmatpush1.bf16.msra.mxu0 0
  %381 = vmatprep.mubr.bf16.mxu0 0
  %382 = vmatmul.mubr.bf16.gmra.mrb[0].mxu0 %v347
  %v383 = vpop.f32.mrb[0].mxu0
  %v384 = vadd.f32 %v329, %v383
  %v385 = vpop.f32.mrb[0].mxu0
  %v386 = vpop.f32.mrb[0].mxu0
  %v387 = vpop.f32.mrb[0].mxu0
  %388 = vdwg.mxu0
  %389 = vst [vmem:[%s5] sm:$0xff] %v384
  // Predicated region
  $region22: #{lstm_model_forward.3} parent=0 // pred_check
    _
  $region23: #{lstm_model_forward.3} parent=0 // pred_check_branch
    %391 = sbr.rel (0) target = $region25
  $region24: #{lstm_model_forward.3} parent=0 // pred_region
    _
  $region25: #{lstm_model_forward.3} parent=0 // pred_fallthru
    _
  // Predicated region
  $region26: #{lstm_model_forward.3} parent=0 // pred_check
    _
  $region27: #{lstm_model_forward.3} parent=0 // pred_check_branch
    %393 = sbr.rel (0) target = $region29
  $region28: #{lstm_model_forward.3} parent=0 // pred_region
    _
  $region29: #{lstm_model_forward.3} parent=0 // pred_fallthru
    _

// kernel: lstm_model_forward.2
$region0: #{lstm_model_forward.2}
  #allocation0 [shape = 'u32[]', space=smem, size = 0x4, offset = 0x4, fixed_abs, tag = 'smem constant byte address 0x4 - core index']
  #allocation1 [shape = 'u32[144,128]{1,0:T(1,128)}', space=vmem, size = 0x12000, scoped, tag = 'internal scratch']
  %s0 = inlined_call_operand.vmem [shape: bf16[8,768], index: 0, kind: input, shape index: {}]
  %s1 = inlined_call_operand.vmem [shape: bf16[768,96], index: 1, kind: input, shape index: {}]
  %s2 = inlined_call_operand.vmem [shape: f32[1,8,96], index: 2, kind: output, shape index: {}]
  %s3 = sld [smem:[#allocation0]]
  $region22: #{lstm_model_forward.2} parent=0
    _
  %s5 = ssub.s32 1, %s3
  %s6 = scalar_select 0, %s5, %s3
  // Predicated region
  $region2: #{lstm_model_forward.2} parent=0 // pred_check
    _
  $region3: #{lstm_model_forward.2} parent=0 // pred_check_branch
    %8 = sbr.rel (0) target = $region5
  $region4: #{lstm_model_forward.2} parent=0 // pred_region
    %s9 = sadd.s32 0, 0
    %s10 = smul.u32 6, %s9
    %p11 = scmp.lt.s32.totalorder %s10, 5
    %s12 = scalar_select %p11, %s10, 5
    %s13 = smul.addr %s12, 4
    %s14 = scalar_lea.vmem %s0, %s13
    %s15 = sadd.s32 0, 0
    %s16 = smul.u32 6, %s15
  $region5: #{lstm_model_forward.2} parent=0 // pred_fallthru
    _
  // Predicated region
  $region6: #{lstm_model_forward.2} parent=0 // pred_check
    _
  $region7: #{lstm_model_forward.2} parent=0 // pred_check_branch
    %18 = sbr.rel (0) target = $region9
  $region8: #{lstm_model_forward.2} parent=0 // pred_region
    %s19 = sadd.s32 0, 0
    %s20 = smul.u32 96, %s19
    %p21 = scmp.lt.s32.totalorder %s20, 95
    %s22 = scalar_select %p21, %s20, 95
    %s23 = smul.addr %s22, 4
    %s24 = scalar_lea.vmem %s1, %s23
    %s25 = sadd.s32 0, 0
    %s26 = smul.u32 96, %s25
  $region9: #{lstm_model_forward.2} parent=0 // pred_fallthru
    _
  %s27 = sadd.s32 0, 0
  %s28 = smul.u32 6, %s27
  %p29 = scmp.lt.s32.totalorder %s28, 5
  %s30 = scalar_select %p29, %s28, 5
  %s31 = smul.addr %s30, 4
  %s32 = scalar_lea.vmem %s0, %s31
  %s33 = sadd.s32 0, 0
  %s34 = smul.u32 96, %s33
  %p35 = scmp.lt.s32.totalorder %s34, 95
  %s36 = scalar_select %p35, %s34, 95
  %s37 = smul.addr %s36, 4
  %s38 = scalar_lea.vmem %s1, %s37
  %s39 = sadd.s32 0, 0
  %s40 = smul.u32 6, %s39
  %p41 = scmp.lt.s32.totalorder %s40, 5
  %s42 = scalar_select %p41, %s40, 5
  %s43 = smul.addr %s42, 4
  %s44 = scalar_lea.vmem %s0, %s43
  %s45 = sadd.s32 0, 0
  %s46 = smul.u32 6, %s45
  %s47 = sadd.s32 0, 0
  %s48 = smul.u32 96, %s47
  %p49 = scmp.lt.s32.totalorder %s48, 95
  %s50 = scalar_select %p49, %s48, 95
  %s51 = smul.addr %s50, 4
  %s52 = scalar_lea.vmem %s1, %s51
  %s53 = sadd.s32 0, 0
  %s54 = smul.u32 96, %s53
  %p56 = scmp.eq.s32.totalorder 0, 0
  // Predicated region
  $region10: #{lstm_model_forward.2} parent=0 // pred_check
    %p57 = pneg %p56
  $region11: #{lstm_model_forward.2} parent=0 // pred_check_branch
    %59 = sbr.rel (%p57) target = $region13
  $region12: #{lstm_model_forward.2} parent=0 // pred_region
    %vm60 = vcmask 785408
    %61 = vst.msk [vmem:[%s2] sm:$0xff] %vm60, 0.0
  $region13: #{lstm_model_forward.2} parent=0 // pred_fallthru
    _
  %v62 = vld [vmem:[%s2] sm:$0xff]
  %v63 = vld [vmem:[%s44] sm:$0xff]
  %v64 = vld [vmem:[%s44 + $0x8] sm:$0xff]
  %v65 = vld [vmem:[%s44 + $0x10] sm:$0xff]
  %v66 = vld [vmem:[%s52] sm:$0xf]
  %v67 = vld [vmem:[%s52 + $0x4] sm:$0xf]
  %v68 = vld [vmem:[%s52 + $0x8] sm:$0xf]
  %v69 = vld [vmem:[%s52 + $0xc] sm:$0xf]
  %v70 = vld [vmem:[%s52 + $0x10] sm:$0xf]
  %v71 = vld [vmem:[%s52 + $0x14] sm:$0xf]
  %v72 = vld [vmem:[%s52 + $0x18] sm:$0xf]
  %v73 = vld [vmem:[%s52 + $0x1c] sm:$0xf]
  %v74 = vld [vmem:[%s52 + $0x20] sm:$0xf]
  %v75 = vld [vmem:[%s52 + $0x24] sm:$0xf]
  %v76 = vld [vmem:[%s52 + $0x28] sm:$0xf]
  %v77 = vld [vmem:[%s52 + $0x2c] sm:$0xf]
  %v78 = vld [vmem:[%s52 + $0x30] sm:$0xf]
  %v79 = vld [vmem:[%s52 + $0x34] sm:$0xf]
  %v80 = vld [vmem:[%s52 + $0x38] sm:$0xf]
  %v81 = vld [vmem:[%s52 + $0x3c] sm:$0xf]
  %v82 = vld [vmem:[%s52 + $0x40] sm:$0xf]
  %v83 = vld [vmem:[%s52 + $0x44] sm:$0xf]
  %v84 = vld [vmem:[%s52 + $0x48] sm:$0xf]
  %v85 = vld [vmem:[%s52 + $0x4c] sm:$0xf]
  %v86 = vld [vmem:[%s52 + $0x50] sm:$0xf]
  %v87 = vld [vmem:[%s52 + $0x54] sm:$0xf]
  %v88 = vld [vmem:[%s52 + $0x58] sm:$0xf]
  %v89 = vld [vmem:[%s52 + $0x5c] sm:$0xf]
  %v90 = vld [vmem:[%s52 + $0x60] sm:$0xf]
  %v91 = vld [vmem:[%s52 + $0x64] sm:$0xf]
  %v92 = vld [vmem:[%s52 + $0x68] sm:$0xf]
  %v93 = vld [vmem:[%s52 + $0x6c] sm:$0xf]
  %v94 = vld [vmem:[%s52 + $0x70] sm:$0xf]
  %v95 = vld [vmem:[%s52 + $0x74] sm:$0xf]
  %v96 = vld [vmem:[%s52 + $0x78] sm:$0xf]
  %v97 = vld [vmem:[%s52 + $0x7c] sm:$0xf]
  %v98 = vld [vmem:[%s52 + $0x80] sm:$0xf]
  %v99 = vld [vmem:[%s52 + $0x84] sm:$0xf]
  %v100 = vld [vmem:[%s52 + $0x88] sm:$0xf]
  %v101 = vld [vmem:[%s52 + $0x8c] sm:$0xf]
  %v102 = vld [vmem:[%s52 + $0x90] sm:$0xf]
  %v103 = vld [vmem:[%s52 + $0x94] sm:$0xf]
  %v104 = vld [vmem:[%s52 + $0x98] sm:$0xf]
  %v105 = vld [vmem:[%s52 + $0x9c] sm:$0xf]
  %v106 = vld [vmem:[%s52 + $0xa0] sm:$0xf]
  %v107 = vld [vmem:[%s52 + $0xa4] sm:$0xf]
  %v108 = vld [vmem:[%s52 + $0xa8] sm:$0xf]
  %v109 = vld [vmem:[%s52 + $0xac] sm:$0xf]
  %v110 = vld [vmem:[%s52 + $0xb0] sm:$0xf]
  %v111 = vld [vmem:[%s52 + $0xb4] sm:$0xf]
  %v112 = vld [vmem:[%s52 + $0xb8] sm:$0xf]
  %v113 = vld [vmem:[%s52 + $0xbc] sm:$0xf]
  %v114 = vld [vmem:[%s52 + $0xc0] sm:$0xf]
  %v115 = vld [vmem:[%s52 + $0xc4] sm:$0xf]
  %v116 = vld [vmem:[%s52 + $0xc8] sm:$0xf]
  %v117 = vld [vmem:[%s52 + $0xcc] sm:$0xf]
  %v118 = vld [vmem:[%s52 + $0xd0] sm:$0xf]
  %v119 = vld [vmem:[%s52 + $0xd4] sm:$0xf]
  %v120 = vld [vmem:[%s52 + $0xd8] sm:$0xf]
  %v121 = vld [vmem:[%s52 + $0xdc] sm:$0xf]
  %v122 = vld [vmem:[%s52 + $0xe0] sm:$0xf]
  %v123 = vld [vmem:[%s52 + $0xe4] sm:$0xf]
  %v124 = vld [vmem:[%s52 + $0xe8] sm:$0xf]
  %v125 = vld [vmem:[%s52 + $0xec] sm:$0xf]
  %v126 = vld [vmem:[%s52 + $0xf0] sm:$0xf]
  %v127 = vld [vmem:[%s52 + $0xf4] sm:$0xf]
  %v128 = vld [vmem:[%s52 + $0xf8] sm:$0xf]
  %v129 = vld [vmem:[%s52 + $0xfc] sm:$0xf]
  %v130 = vld [vmem:[%s52 + $0x100] sm:$0xf]
  %v131 = vld [vmem:[%s52 + $0x104] sm:$0xf]
  %v132 = vld [vmem:[%s52 + $0x108] sm:$0xf]
  %v133 = vld [vmem:[%s52 + $0x10c] sm:$0xf]
  %v134 = vld [vmem:[%s52 + $0x110] sm:$0xf]
  %v135 = vld [vmem:[%s52 + $0x114] sm:$0xf]
  %v136 = vld [vmem:[%s52 + $0x118] sm:$0xf]
  %v137 = vld [vmem:[%s52 + $0x11c] sm:$0xf]
  %v138 = vld [vmem:[%s52 + $0x120] sm:$0xf]
  %v139 = vld [vmem:[%s52 + $0x124] sm:$0xf]
  %v140 = vld [vmem:[%s52 + $0x128] sm:$0xf]
  %v141 = vld [vmem:[%s52 + $0x12c] sm:$0xf]
  %v142 = vld [vmem:[%s52 + $0x130] sm:$0xf]
  %v143 = vld [vmem:[%s52 + $0x134] sm:$0xf]
  %v144 = vld [vmem:[%s52 + $0x138] sm:$0xf]
  %v145 = vld [vmem:[%s52 + $0x13c] sm:$0xf]
  %v146 = vld [vmem:[%s52 + $0x140] sm:$0xf]
  %v147 = vld [vmem:[%s52 + $0x144] sm:$0xf]
  %v148 = vld [vmem:[%s52 + $0x148] sm:$0xf]
  %v149 = vld [vmem:[%s52 + $0x14c] sm:$0xf]
  %v150 = vld [vmem:[%s52 + $0x150] sm:$0xf]
  %v151 = vld [vmem:[%s52 + $0x154] sm:$0xf]
  %v152 = vld [vmem:[%s52 + $0x158] sm:$0xf]
  %v153 = vld [vmem:[%s52 + $0x15c] sm:$0xf]
  %v154 = vld [vmem:[%s52 + $0x160] sm:$0xf]
  %v155 = vld [vmem:[%s52 + $0x164] sm:$0xf]
  %v156 = vld [vmem:[%s52 + $0x168] sm:$0xf]
  %v157 = vld [vmem:[%s52 + $0x16c] sm:$0xf]
  %v158 = vld [vmem:[%s52 + $0x170] sm:$0xf]
  %v159 = vld [vmem:[%s52 + $0x174] sm:$0xf]
  %v160 = vld [vmem:[%s52 + $0x178] sm:$0xf]
  %v161 = vld [vmem:[%s52 + $0x17c] sm:$0xf]
  %v165 = vunpack.c.l.b16 %v63
  %v166 = vunpack.c.h.b16 %v63
  %v167 = vunpack.c.l.b16 %v64
  %v168 = vunpack.c.h.b16 %v64
  %v169 = vunpack.c.l.b16 %v65
  %v170 = vunpack.c.h.b16 %v65
  %v171 = vpack.c.b16 %v165, %v165
  %v172 = vpack.c.b16 %v166, %v166
  %v173 = vpack.c.b16 %v167, %v167
  %v174 = vpack.c.b16 %v168, %v168
  %v175 = vpack.c.b16 %v169, %v169
  %v176 = vpack.c.b16 %v170, %v170
  %v279 = vunpack.c.l.b16 %v66
  %v280 = vunpack.c.l.b16 %v67
  %v281 = vunpack.c.l.b16 %v68
  %v282 = vunpack.c.l.b16 %v69
  %v283 = vunpack.c.l.b16 %v70
  %v284 = vunpack.c.l.b16 %v71
  %v285 = vunpack.c.l.b16 %v72
  %v286 = vunpack.c.l.b16 %v73
  %v287 = vunpack.c.l.b16 %v74
  %v288 = vunpack.c.l.b16 %v75
  %v289 = vunpack.c.l.b16 %v76
  %v290 = vunpack.c.l.b16 %v77
  %v291 = vunpack.c.l.b16 %v78
  %v292 = vunpack.c.l.b16 %v79
  %v293 = vunpack.c.l.b16 %v80
  %v294 = vunpack.c.l.b16 %v81
  %v295 = vunpack.c.l.b16 %v82
  %v296 = vunpack.c.l.b16 %v83
  %v297 = vunpack.c.l.b16 %v84
  %v298 = vunpack.c.l.b16 %v85
  %v299 = vunpack.c.l.b16 %v86
  %v300 = vunpack.c.l.b16 %v87
  %v301 = vunpack.c.l.b16 %v88
  %v302 = vunpack.c.l.b16 %v89
  %v303 = vunpack.c.l.b16 %v90
  %v304 = vunpack.c.l.b16 %v91
  %v305 = vunpack.c.l.b16 %v92
  %v306 = vunpack.c.l.b16 %v93
  %v307 = vunpack.c.l.b16 %v94
  %v308 = vunpack.c.l.b16 %v95
  %v309 = vunpack.c.l.b16 %v96
  %v310 = vunpack.c.l.b16 %v97
  %v311 = vunpack.c.l.b16 %v98
  %v312 = vunpack.c.l.b16 %v99
  %v313 = vunpack.c.l.b16 %v100
  %v314 = vunpack.c.l.b16 %v101
  %v315 = vunpack.c.l.b16 %v102
  %v316 = vunpack.c.l.b16 %v103
  %v317 = vunpack.c.l.b16 %v104
  %v318 = vunpack.c.l.b16 %v105
  %v319 = vunpack.c.l.b16 %v106
  %v320 = vunpack.c.l.b16 %v107
  %v321 = vunpack.c.l.b16 %v108
  %v322 = vunpack.c.l.b16 %v109
  %v323 = vunpack.c.l.b16 %v110
  %v324 = vunpack.c.l.b16 %v111
  %v325 = vunpack.c.l.b16 %v112
  %v326 = vunpack.c.l.b16 %v113
  %v327 = vunpack.c.l.b16 %v114
  %v328 = vunpack.c.l.b16 %v115
  %v329 = vunpack.c.l.b16 %v116
  %v330 = vunpack.c.l.b16 %v117
  %v331 = vunpack.c.l.b16 %v118
  %v332 = vunpack.c.l.b16 %v119
  %v333 = vunpack.c.l.b16 %v120
  %v334 = vunpack.c.l.b16 %v121
  %v335 = vunpack.c.l.b16 %v122
  %v336 = vunpack.c.l.b16 %v123
  %v337 = vunpack.c.l.b16 %v124
  %v338 = vunpack.c.l.b16 %v125
  %v339 = vunpack.c.l.b16 %v126
  %v340 = vunpack.c.l.b16 %v127
  %v341 = vunpack.c.l.b16 %v128
  %v342 = vunpack.c.l.b16 %v129
  %v343 = vunpack.c.l.b16 %v130
  %v344 = vunpack.c.l.b16 %v131
  %v345 = vunpack.c.l.b16 %v132
  %v346 = vunpack.c.l.b16 %v133
  %v347 = vunpack.c.l.b16 %v134
  %v348 = vunpack.c.l.b16 %v135
  %v349 = vunpack.c.l.b16 %v136
  %v350 = vunpack.c.l.b16 %v137
  %v351 = vunpack.c.l.b16 %v138
  %v352 = vunpack.c.l.b16 %v139
  %v353 = vunpack.c.l.b16 %v140
  %v354 = vunpack.c.l.b16 %v141
  %v355 = vunpack.c.l.b16 %v142
  %v356 = vunpack.c.l.b16 %v143
  %v357 = vunpack.c.l.b16 %v144
  %v358 = vunpack.c.l.b16 %v145
  %v359 = vunpack.c.l.b16 %v146
  %v360 = vunpack.c.l.b16 %v147
  %v361 = vunpack.c.l.b16 %v148
  %v362 = vunpack.c.l.b16 %v149
  %v363 = vunpack.c.l.b16 %v150
  %v364 = vunpack.c.l.b16 %v151
  %v365 = vunpack.c.l.b16 %v152
  %v366 = vunpack.c.l.b16 %v153
  %v367 = vunpack.c.l.b16 %v154
  %v368 = vunpack.c.l.b16 %v155
  %v369 = vunpack.c.l.b16 %v156
  %v370 = vunpack.c.l.b16 %v157
  %v371 = vunpack.c.l.b16 %v158
  %v372 = vunpack.c.l.b16 %v159
  %v373 = vunpack.c.l.b16 %v160
  %v374 = vunpack.c.l.b16 %v161
  %v375 = vpack.c.b16 %v280, %v279
  %v376 = vpack.c.b16 %v282, %v281
  %v377 = vpack.c.b16 %v284, %v283
  %v378 = vpack.c.b16 %v286, %v285
  %v379 = vpack.c.b16 %v288, %v287
  %v380 = vpack.c.b16 %v290, %v289
  %v381 = vpack.c.b16 %v292, %v291
  %v382 = vpack.c.b16 %v294, %v293
  %v383 = vpack.c.b16 %v296, %v295
  %v384 = vpack.c.b16 %v298, %v297
  %v385 = vpack.c.b16 %v300, %v299
  %v386 = vpack.c.b16 %v302, %v301
  %v387 = vpack.c.b16 %v304, %v303
  %v388 = vpack.c.b16 %v306, %v305
  %v389 = vpack.c.b16 %v308, %v307
  %v390 = vpack.c.b16 %v310, %v309
  %v391 = vpack.c.b16 %v312, %v311
  %v392 = vpack.c.b16 %v314, %v313
  %v393 = vpack.c.b16 %v316, %v315
  %v394 = vpack.c.b16 %v318, %v317
  %v395 = vpack.c.b16 %v320, %v319
  %v396 = vpack.c.b16 %v322, %v321
  %v397 = vpack.c.b16 %v324, %v323
  %v398 = vpack.c.b16 %v326, %v325
  %v399 = vpack.c.b16 %v328, %v327
  %v400 = vpack.c.b16 %v330, %v329
  %v401 = vpack.c.b16 %v332, %v331
  %v402 = vpack.c.b16 %v334, %v333
  %v403 = vpack.c.b16 %v336, %v335
  %v404 = vpack.c.b16 %v338, %v337
  %v405 = vpack.c.b16 %v340, %v339
  %v406 = vpack.c.b16 %v342, %v341
  %v407 = vpack.c.b16 %v344, %v343
  %v408 = vpack.c.b16 %v346, %v345
  %v409 = vpack.c.b16 %v348, %v347
  %v410 = vpack.c.b16 %v350, %v349
  %v411 = vpack.c.b16 %v352, %v351
  %v412 = vpack.c.b16 %v354, %v353
  %v413 = vpack.c.b16 %v356, %v355
  %v414 = vpack.c.b16 %v358, %v357
  %v415 = vpack.c.b16 %v360, %v359
  %v416 = vpack.c.b16 %v362, %v361
  %v417 = vpack.c.b16 %v364, %v363
  %v418 = vpack.c.b16 %v366, %v365
  %v419 = vpack.c.b16 %v368, %v367
  %v420 = vpack.c.b16 %v370, %v369
  %v421 = vpack.c.b16 %v372, %v371
  %v422 = vpack.c.b16 %v374, %v373
  %471 = vmatprep.subr.bf16.mxu0 0
  %472 = vmatpush1.bf16.msra.mxu0 %v375
  %473 = vmatprep.subr.bf16.mxu0 0
  %474 = vmatpush1.bf16.msra.mxu0 %v376
  %475 = vmatprep.subr.bf16.mxu0 0
  %476 = vmatpush1.bf16.msra.mxu0 %v377
  %477 = vmatprep.subr.bf16.mxu0 0
  %478 = vmatpush1.bf16.msra.mxu0 %v378
  %479 = vmatprep.subr.bf16.mxu0 0
  %480 = vmatpush1.bf16.msra.mxu0 %v379
  %481 = vmatprep.subr.bf16.mxu0 0
  %482 = vmatpush1.bf16.msra.mxu0 %v380
  %483 = vmatprep.subr.bf16.mxu0 0
  %484 = vmatpush1.bf16.msra.mxu0 %v381
  %485 = vmatprep.subr.bf16.mxu0 0
  %486 = vmatpush1.bf16.msra.mxu0 %v382
  %487 = vmatprep.subr.bf16.mxu0 0
  %488 = vmatpush1.bf16.msra.mxu0 %v383
  %489 = vmatprep.subr.bf16.mxu0 0
  %490 = vmatpush1.bf16.msra.mxu0 %v384
  %491 = vmatprep.subr.bf16.mxu0 0
  %492 = vmatpush1.bf16.msra.mxu0 %v385
  %493 = vmatprep.subr.bf16.mxu0 0
  %494 = vmatpush1.bf16.msra.mxu0 %v386
  %495 = vmatprep.subr.bf16.mxu0 0
  %496 = vmatpush1.bf16.msra.mxu0 %v387
  %497 = vmatprep.subr.bf16.mxu0 0
  %498 = vmatpush1.bf16.msra.mxu0 %v388
  %499 = vmatprep.subr.bf16.mxu0 0
  %500 = vmatpush1.bf16.msra.mxu0 %v389
  %501 = vmatprep.subr.bf16.mxu0 0
  %502 = vmatpush1.bf16.msra.mxu0 %v390
  %503 = vmatprep.mubr.bf16.mxu0 %v172
  %504 = vmatmul.mubr.bf16.gmra.mrb[0].mxu0 %v171
  %v505 = vpop.f32.mrb[0].mxu0
  %v506 = vadd.f32 0.0, %v505
  %v507 = vpop.f32.mrb[0].mxu0
  %v508 = vpop.f32.mrb[0].mxu0
  %v509 = vpop.f32.mrb[0].mxu0
  %510 = vdwg.mxu0
  %511 = vmatprep.subr.bf16.mxu0 0
  %512 = vmatpush1.bf16.msra.mxu0 %v391
  %513 = vmatprep.subr.bf16.mxu0 0
  %514 = vmatpush1.bf16.msra.mxu0 %v392
  %515 = vmatprep.subr.bf16.mxu0 0
  %516 = vmatpush1.bf16.msra.mxu0 %v393
  %517 = vmatprep.subr.bf16.mxu0 0
  %518 = vmatpush1.bf16.msra.mxu0 %v394
  %519 = vmatprep.subr.bf16.mxu0 0
  %520 = vmatpush1.bf16.msra.mxu0 %v395
  %521 = vmatprep.subr.bf16.mxu0 0
  %522 = vmatpush1.bf16.msra.mxu0 %v396
  %523 = vmatprep.subr.bf16.mxu0 0
  %524 = vmatpush1.bf16.msra.mxu0 %v397
  %525 = vmatprep.subr.bf16.mxu0 0
  %526 = vmatpush1.bf16.msra.mxu0 %v398
  %527 = vmatprep.subr.bf16.mxu0 0
  %528 = vmatpush1.bf16.msra.mxu0 %v399
  %529 = vmatprep.subr.bf16.mxu0 0
  %530 = vmatpush1.bf16.msra.mxu0 %v400
  %531 = vmatprep.subr.bf16.mxu0 0
  %532 = vmatpush1.bf16.msra.mxu0 %v401
  %533 = vmatprep.subr.bf16.mxu0 0
  %534 = vmatpush1.bf16.msra.mxu0 %v402
  %535 = vmatprep.subr.bf16.mxu0 0
  %536 = vmatpush1.bf16.msra.mxu0 %v403
  %537 = vmatprep.subr.bf16.mxu0 0
  %538 = vmatpush1.bf16.msra.mxu0 %v404
  %539 = vmatprep.subr.bf16.mxu0 0
  %540 = vmatpush1.bf16.msra.mxu0 %v405
  %541 = vmatprep.subr.bf16.mxu0 0
  %542 = vmatpush1.bf16.msra.mxu0 %v406
  %543 = vmatprep.mubr.bf16.mxu0 %v174
  %544 = vmatmul.mubr.bf16.gmra.mrb[0].mxu0 %v173
  %v545 = vpop.f32.mrb[0].mxu0
  %v546 = vadd.f32 %v506, %v545
  %v547 = vpop.f32.mrb[0].mxu0
  %v548 = vpop.f32.mrb[0].mxu0
  %v549 = vpop.f32.mrb[0].mxu0
  %550 = vdwg.mxu0
  %551 = vmatprep.subr.bf16.mxu0 0
  %552 = vmatpush1.bf16.msra.mxu0 %v407
  %553 = vmatprep.subr.bf16.mxu0 0
  %554 = vmatpush1.bf16.msra.mxu0 %v408
  %555 = vmatprep.subr.bf16.mxu0 0
  %556 = vmatpush1.bf16.msra.mxu0 %v409
  %557 = vmatprep.subr.bf16.mxu0 0
  %558 = vmatpush1.bf16.msra.mxu0 %v410
  %559 = vmatprep.subr.bf16.mxu0 0
  %560 = vmatpush1.bf16.msra.mxu0 %v411
  %561 = vmatprep.subr.bf16.mxu0 0
  %562 = vmatpush1.bf16.msra.mxu0 %v412
  %563 = vmatprep.subr.bf16.mxu0 0
  %564 = vmatpush1.bf16.msra.mxu0 %v413
  %565 = vmatprep.subr.bf16.mxu0 0
  %566 = vmatpush1.bf16.msra.mxu0 %v414
  %567 = vmatprep.subr.bf16.mxu0 0
  %568 = vmatpush1.bf16.msra.mxu0 %v415
  %569 = vmatprep.subr.bf16.mxu0 0
  %570 = vmatpush1.bf16.msra.mxu0 %v416
  %571 = vmatprep.subr.bf16.mxu0 0
  %572 = vmatpush1.bf16.msra.mxu0 %v417
  %573 = vmatprep.subr.bf16.mxu0 0
  %574 = vmatpush1.bf16.msra.mxu0 %v418
  %575 = vmatprep.subr.bf16.mxu0 0
  %576 = vmatpush1.bf16.msra.mxu0 %v419
  %577 = vmatprep.subr.bf16.mxu0 0
  %578 = vmatpush1.bf16.msra.mxu0 %v420
  %579 = vmatprep.subr.bf16.mxu0 0
  %580 = vmatpush1.bf16.msra.mxu0 %v421
  %581 = vmatprep.subr.bf16.mxu0 0
  %582 = vmatpush1.bf16.msra.mxu0 %v422
  %583 = vmatprep.mubr.bf16.mxu0 %v176
  %584 = vmatmul.mubr.bf16.gmra.mrb[0].mxu0 %v175
  %v585 = vpop.f32.mrb[0].mxu0
  %v586 = vadd.f32 %v546, %v585
  %v587 = vpop.f32.mrb[0].mxu0
  %v588 = vpop.f32.mrb[0].mxu0
  %v589 = vpop.f32.mrb[0].mxu0
  %590 = vdwg.mxu0
  %v591 = vadd.f32 %v62, %v586
  %vm592 = vcmask 785408
  %593 = vst.msk [vmem:[%s2] sm:$0xff] %vm592, %v591
  // Predicated region
  $region14: #{lstm_model_forward.2} parent=0 // pred_check
    _
  $region15: #{lstm_model_forward.2} parent=0 // pred_check_branch
    %595 = sbr.rel (0) target = $region17
  $region16: #{lstm_model_forward.2} parent=0 // pred_region
    _
  $region17: #{lstm_model_forward.2} parent=0 // pred_fallthru
    _
  // Predicated region
  $region18: #{lstm_model_forward.2} parent=0 // pred_check
    _
  $region19: #{lstm_model_forward.2} parent=0 // pred_check_branch
    %597 = sbr.rel (0) target = $region21
  $region20: #{lstm_model_forward.2} parent=0 // pred_region
    _
  $region21: #{lstm_model_forward.2} parent=0 // pred_fallthru
    _

</llo_original>
